<compile_context>
chip_gen: v7x
topology: tpu7x:2x2x1
jax: 0.10.0
libtpu: 0.0.40
codegen_flags: <defaults>
</compile_context>

<pallas_src>
import jax
import jax.numpy as jnp
import numpy as np
from jax import lax
from jax.experimental import pallas as pl
from jax.experimental.pallas import tpu as pltpu


def _round_up(x, m):
    return (x + m - 1) // m * m


def _vmem_capacity_bytes():
    try:
        return int(pltpu.get_tpu_info().vmem_capacity_bytes)
    except Exception:
        return 64 * 2**20  # conservative: v7x per-TensorCore VMEM


def _select_tdt(DsP, DtP, w_itemsize, cap_bytes):
    """Largest Dt tile (multiple of 128, divides DtP) whose double-buffered
    weight tile fits the VMEM budget."""
    budget = min(40 * 2**20, cap_bytes // 2)
    if 2 * DsP * DtP * w_itemsize <= budget:
        return DtP
    t = DtP
    while t > 128:
        if DtP % t == 0 and 2 * DsP * t * w_itemsize <= budget:
            return t
        t -= 128
    return 128


def _pkd_kernel(bsz_ref, xs_ref, xt_ref, w_ref, b_ref, out_ref,
                ss_ref, st_ref, sct_ref):
    """grid=(L, DtP//TDt). One step = one (layer, Dt-tile) pair."""
    j = pl.program_id(1)

    @pl.when(j == 0)
    def _():
        ss_ref[...] = jnp.zeros_like(ss_ref)
        st_ref[...] = jnp.zeros_like(st_ref)
        sct_ref[...] = jnp.zeros_like(sct_ref)

    xs = xs_ref[0]                                    # [Bp, DsP]  native dtype
    w = w_ref[0]                                      # [DsP, TDt] native dtype
    # MXU matmul in native dtype (full-rate bf16), f32 accumulation; bias added
    # after the dot (no folded bias row / ones column -> no extra weight block).
    xc = jnp.dot(xs, w, preferred_element_type=jnp.float32)      # [Bp, TDt] f32
    xc = xc + b_ref[0].astype(jnp.float32)                       # [1, TDt] bias
    xt = xt_ref[0].astype(jnp.float32)                           # [Bp, TDt] f32

    # Per-row partial sums across the Dt tiles (needed for the cosine form).
    ss_ref[...] += jnp.sum(xc * xc, axis=-1, keepdims=True)      # [Bp, 1]
    st_ref[...] += jnp.sum(xt * xt, axis=-1, keepdims=True)
    sct_ref[...] += jnp.sum(xc * xt, axis=-1, keepdims=True)

    @pl.when(j == pl.num_programs(1) - 1)
    def _():
        batch = bsz_ref[0]
        bf = batch.astype(jnp.float32)
        eps = jnp.float32(1e-12)                      # keeps zero rows finite
        inv_ns = lax.rsqrt(jnp.maximum(ss_ref[...], eps))
        inv_nt = lax.rsqrt(jnp.maximum(st_ref[...], eps))
        cos = sct_ref[...] * inv_ns * inv_nt          # [Bp, 1]
        row = lax.broadcasted_iota(jnp.int32, cos.shape, 0)
        cos = jnp.where(row < batch, cos, 0.0)        # drop padded batch rows
        # sum_b ||a-t||^2 / B  ==  2 - (2/B) * sum_b cos_b
        layer_loss = 2.0 - (2.0 / bf) * jnp.sum(cos)
        out_ref[...] = jnp.full((1, 8, 128), layer_loss, dtype=jnp.float32)


def pkd_loss_pallas(xs_pad, xt_pad, w_packed, b_packed, batch_size, tdt=None):
    """xs_pad: [L,Bp,DsP], xt_pad: [L,Bp,DtP] (f32), w_packed: [L,DsP,DtP],
    b_packed: [L,1,DtP] (f32)."""
    L, Bp, DsP = xs_pad.shape
    DtP = xt_pad.shape[-1]
    xs_item = jnp.dtype(xs_pad.dtype).itemsize
    xt_item = jnp.dtype(xt_pad.dtype).itemsize
    w_item = jnp.dtype(w_packed.dtype).itemsize

    cap = _vmem_capacity_bytes()
    if tdt is None:
        tdt = _select_tdt(DsP, DtP, w_item, cap)
    nj = DtP // tdt

    # Exact double-buffer accounting (generation-aware cap, never above VMEM).
    in_bytes = 2 * (Bp * DsP * xs_item + Bp * tdt * xt_item
                    + DsP * tdt * w_item + tdt * 4)
    tmp_bytes = 2 * Bp * tdt * 4            # xc / xt f32 temporaries
    out_bytes = 2 * 8 * 128 * 4
    scratch_bytes = 3 * Bp * 128 * 4        # conservative lane padding
    want = 2 * (in_bytes + tmp_bytes + out_bytes + scratch_bytes)
    vmem_limit = int(min(cap - 8 * 2**20, max(16 * 2**20, want)))

    cost = pl.CostEstimate(
        flops=2 * L * Bp * DsP * DtP,
        transcendentals=2 * L * Bp,
        bytes_accessed=L * (Bp * DsP * xs_item + Bp * DtP * xt_item
                            + DsP * DtP * w_item + DtP * 4) + L * 8 * 128 * 4)

    out = pl.pallas_call(
        _pkd_kernel,
        out_shape=jax.ShapeDtypeStruct((L, 8, 128), jnp.float32),
        grid_spec=pltpu.PrefetchScalarGridSpec(
            num_scalar_prefetch=1,                     # batch size lives in SMEM
            grid=(L, nj),
            in_specs=[
                pl.BlockSpec((1, Bp, DsP), lambda i, j, b: (i, 0, 0)),
                pl.BlockSpec((1, Bp, tdt), lambda i, j, b: (i, 0, j)),
                pl.BlockSpec((1, DsP, tdt), lambda i, j, b: (i, 0, j)),
                pl.BlockSpec((1, 1, tdt), lambda i, j, b: (i, 0, j)),
            ],
            out_specs=pl.BlockSpec((1, 8, 128), lambda i, j, b: (i, 0, 0)),
            scratch_shapes=[pltpu.VMEM((Bp, 1), jnp.float32),
                            pltpu.VMEM((Bp, 1), jnp.float32),
                            pltpu.VMEM((Bp, 1), jnp.float32)],
        ),
        compiler_params=pltpu.CompilerParams(
            dimension_semantics=("parallel", "arbitrary"),  # layers across TCs
            vmem_limit_bytes=vmem_limit),
        cost_estimate=cost,
    )(jnp.asarray([batch_size], jnp.int32), xs_pad, xt_pad, w_packed, b_packed)
    return jnp.sum(out[:, 0, 0])


def prepare_pkd_align_params(weights, biases, student_dims, teacher_dims,
                             num_kd_layers, compute_dtype=jnp.float32):
    """One-time packing of the align Linear parameters (module-init analogue).

    weights[i]: [teacher_dims, student_dims] (PyTorch nn.Linear layout), or
    weights=None when student_dims == teacher_dims (align is None).
    Returns (w_packed [L, DsP, DtP] pre-transposed/zero-padded,
             b_packed [L, 1, DtP] f32)."""
    ds, dt = student_dims, teacher_dims
    ds_pad = _round_up(ds, 128)
    dt_pad = _round_up(dt, 128)
    if weights is None:                      # align is None -> identity, zero bias
        weights = [jnp.eye(dt, ds, dtype=jnp.float32)] * num_kd_layers
        biases = [jnp.zeros((dt,), jnp.float32)] * num_kd_layers
    w = jnp.zeros((num_kd_layers, ds_pad, dt_pad), compute_dtype)
    b = jnp.zeros((num_kd_layers, 1, dt_pad), jnp.float32)
    for i in range(num_kd_layers):
        w = w.at[i, :ds, :dt].set(jnp.asarray(weights[i]).T.astype(compute_dtype))
        b = b.at[i, 0, :dt].set(jnp.asarray(biases[i]).astype(jnp.float32))
    return w, b


def pkd_loss(preds_S, preds_T, w_packed, b_packed, student_layers,
             teacher_layers, tdt=None):
    """Per-call glue: CLS slicing, stacking, sublane/lane padding.

    The loss only depends on the CLS (first-token) state and the align Linear
    acts per token, so slicing before the matmul is exact."""
    B = preds_S[0].shape[0]
    Ds = preds_S[0].shape[-1]
    Dt = preds_T[0].shape[-1]
    L, DsP, DtP = w_packed.shape
    dtype = w_packed.dtype
    sub = 8 if jnp.dtype(dtype).itemsize >= 4 else 16   # sublane packing
    Bp = _round_up(B, sub)

    xs = jnp.stack([preds_S[i][:, 0, :] for i in student_layers])   # [L, B, Ds]
    xt = jnp.stack([preds_T[i][:, 0, :] for i in teacher_layers])   # [L, B, Dt]

    xs_pad = jnp.zeros((L, Bp, DsP), dtype).at[:, :B, :Ds].set(xs.astype(dtype))
    # Teacher stays f32 (tiny tile, preserves normalization accuracy in bf16 mode).
    xt_pad = jnp.zeros((L, Bp, DtP), jnp.float32).at[:, :B, :Dt].set(
        xt.astype(jnp.float32))
    return pkd_loss_pallas(xs_pad, xt_pad, w_packed, b_packed, B, tdt=tdt)


def pkd_loss_ref(preds_S, preds_T, weights, biases, student_layers, teacher_layers):
    """Pure-JAX reference mirroring the PyTorch forward exactly."""
    B = preds_S[0].shape[0]
    loss = jnp.float32(0.0)
    for li, (si, ti) in enumerate(zip(student_layers, teacher_layers)):
        xc = jnp.einsum("bnd,td->bnt", preds_S[si], weights[li]) + biases[li]
        xs_c = xc[:, :1, :]
        xt_c = preds_T[ti][:, :1, :]
        ns = jnp.linalg.norm(xs_c, axis=2, keepdims=True)
        nt = jnp.linalg.norm(xt_c, axis=2, keepdims=True)
        loss = loss + jnp.sum((xs_c / ns - xt_c / nt) ** 2) / B
    return loss


if __name__ == "__main__":
    root = jax.random.PRNGKey(0)

    def run_case(B, N, Ds, Dt, L, dtype, tdt=None, seed_off=0):
        keys = jax.random.split(jax.random.fold_in(root, seed_off), 4)
        preds_S = [jax.random.normal(jax.random.fold_in(keys[0], i),
                                     (B, N, Ds), jnp.float32) for i in range(L)]
        preds_T = [jax.random.normal(jax.random.fold_in(keys[1], i),
                                     (B, N, Dt), jnp.float32) for i in range(L)]
        weights = [0.05 * jax.random.normal(jax.random.fold_in(keys[2], i),
                                            (Dt, Ds), jnp.float32) for i in range(L)]
        biases = [0.01 * jax.random.normal(jax.random.fold_in(keys[3], i),
                                           (Dt,), jnp.float32) for i in range(L)]
        sl = list(range(L))
        ref = jax.block_until_ready(
            pkd_loss_ref(preds_S, preds_T, weights, biases, sl, sl))
        w_p, b_p = prepare_pkd_align_params(weights, biases, Ds, Dt, L, dtype)
        out = jax.block_until_ready(
            pkd_loss(preds_S, preds_T, w_p, b_p, sl, sl, tdt=tdt))
        return np.asarray(out), np.asarray(ref)

    # Case 1: single Dt tile per layer, f32 weights (PyTorch default dtype).
    o, r = run_case(B=2, N=8, Ds=32, Dt=64, L=2, dtype=jnp.float32)
    assert np.allclose(o, r, rtol=1e-3, atol=1e-3), (o, r)

    # Case 1b: bf16 deployment path (bf16 weights/student, f32 teacher).
    o, r = run_case(B=2, N=8, Ds=32, Dt=64, L=2, dtype=jnp.bfloat16)
    assert np.allclose(o, r, rtol=5e-2, atol=5e-2), (o, r)

    # Case 2: forced Dt tiling (DtP=256, TDt=128 -> 2 steps/layer) + odd batch,
    # exercising the scratch accumulators, pl.when finalize and SMEM batch size.
    o, r = run_case(B=3, N=4, Ds=48, Dt=200, L=3, dtype=jnp.float32,
                    tdt=128, seed_off=1)
    assert np.allclose(o, r, rtol=1e-3, atol=1e-3), (o, r)

    print("KERNEL_OK")
</pallas_src>

<mosaic_0001>
module attributes {stable_mosaic.version = 11 : i64} {
  func.func @_pkd_kernel(%arg0: i32, %arg1: i32, %arg2: memref<1xi32, #tpu.memory_space<smem>>, %arg3: memref<1x8x128xf32, #tpu.memory_space<vmem>>, %arg4: memref<1x8x128xf32, #tpu.memory_space<vmem>>, %arg5: memref<1x128x128xf32, #tpu.memory_space<vmem>>, %arg6: memref<1x1x128xf32, #tpu.memory_space<vmem>>, %arg7: memref<1x8x128xf32, #tpu.memory_space<vmem>>, %arg8: memref<8x1xf32, #tpu.memory_space<vmem>>, %arg9: memref<8x1xf32, #tpu.memory_space<vmem>>, %arg10: memref<8x1xf32, #tpu.memory_space<vmem>>) attributes {dimension_semantics = [#tpu.dimension_semantics<parallel>, #tpu.dimension_semantics<arbitrary>], iteration_bounds = array<i64: 2, 1>, scalar_prefetch = 1 : i64, scratch_operands = 3 : i64, tpu.core_type = #tpu.core_type<tc>, window_params = [{transform_indices = @transform_0, window_bounds = array<i64: 1, 8, 128>}, {transform_indices = @transform_1, window_bounds = array<i64: 1, 8, 128>}, {transform_indices = @transform_2, window_bounds = array<i64: 1, 128, 128>}, {transform_indices = @transform_3, window_bounds = array<i64: 1, 1, 128>}, {transform_indices = @transform_4, window_bounds = array<i64: 1, 8, 128>}]} {
    %c0_i32 = arith.constant 0 : i32
    %0 = arith.cmpi eq, %arg1, %c0_i32 : i32
    %1 = arith.extui %0 : i1 to i32
    %c0_i32_0 = arith.constant 0 : i32
    %2 = arith.cmpi ne, %1, %c0_i32_0 : i32
    scf.if %2 {
      %cst_29 = arith.constant 0.000000e+00 : f32
      %35 = vector.broadcast %cst_29 : f32 to vector<8x1xf32>
      %c0_30 = arith.constant 0 : index
      %c0_31 = arith.constant 0 : index
      %36 = vector.load %arg8[%c0_30, %c0_31] : memref<8x1xf32, #tpu.memory_space<vmem>>, vector<8x1xf32>
      tpu.vector_store %arg8[%c0_30, %c0_31], %35 {strides = array<i32>} : memref<8x1xf32, #tpu.memory_space<vmem>>, vector<8x1xf32>,
      %cst_32 = arith.constant 0.000000e+00 : f32
      %37 = vector.broadcast %cst_32 : f32 to vector<8x1xf32>
      %c0_33 = arith.constant 0 : index
      %c0_34 = arith.constant 0 : index
      %38 = vector.load %arg9[%c0_33, %c0_34] : memref<8x1xf32, #tpu.memory_space<vmem>>, vector<8x1xf32>
      tpu.vector_store %arg9[%c0_33, %c0_34], %37 {strides = array<i32>} : memref<8x1xf32, #tpu.memory_space<vmem>>, vector<8x1xf32>,
      %cst_35 = arith.constant 0.000000e+00 : f32
      %39 = vector.broadcast %cst_35 : f32 to vector<8x1xf32>
      %c0_36 = arith.constant 0 : index
      %c0_37 = arith.constant 0 : index
      %40 = vector.load %arg10[%c0_36, %c0_37] : memref<8x1xf32, #tpu.memory_space<vmem>>, vector<8x1xf32>
      tpu.vector_store %arg10[%c0_36, %c0_37], %39 {strides = array<i32>} : memref<8x1xf32, #tpu.memory_space<vmem>>, vector<8x1xf32>,
    } else {
    }
    %c0 = arith.constant 0 : index
    %c0_1 = arith.constant 0 : index
    %c0_2 = arith.constant 0 : index
    %3 = vector.load %arg3[%c0, %c0_1, %c0_2] : memref<1x8x128xf32, #tpu.memory_space<vmem>>, vector<1x8x128xf32>
    %4 = vector.shape_cast %3 : vector<1x8x128xf32> to vector<8x128xf32>
    %c0_3 = arith.constant 0 : index
    %c0_4 = arith.constant 0 : index
    %c0_5 = arith.constant 0 : index
    %5 = vector.load %arg5[%c0_3, %c0_4, %c0_5] : memref<1x128x128xf32, #tpu.memory_space<vmem>>, vector<1x128x128xf32>
    %6 = vector.shape_cast %5 : vector<1x128x128xf32> to vector<128x128xf32>
    %cst = arith.constant dense<0.000000e+00> : vector<8x128xf32>
    %7 = tpu.matmul %4, %6, %cst {dimension_numbers = #tpu.dot_dimension_numbers<[1], [0], [0], [1], [0, 0, 1, 1], [], []>} : vector<8x128xf32>, vector<128x128xf32>, vector<8x128xf32> -> vector<8x128xf32>
    %c0_6 = arith.constant 0 : index
    %c0_7 = arith.constant 0 : index
    %c0_8 = arith.constant 0 : index
    %8 = vector.load %arg6[%c0_6, %c0_7, %c0_8] : memref<1x1x128xf32, #tpu.memory_space<vmem>>, vector<1x1x128xf32>
    %9 = vector.shape_cast %8 : vector<1x1x128xf32> to vector<1x128xf32>
    %10 = vector.broadcast %9 : vector<1x128xf32> to vector<8x128xf32>
    %11 = arith.addf %7, %10 : vector<8x128xf32>
    %c0_9 = arith.constant 0 : index
    %c0_10 = arith.constant 0 : index
    %c0_11 = arith.constant 0 : index
    %12 = vector.load %arg4[%c0_9, %c0_10, %c0_11] : memref<1x8x128xf32, #tpu.memory_space<vmem>>, vector<1x8x128xf32>
    %13 = vector.shape_cast %12 : vector<1x8x128xf32> to vector<8x128xf32>
    %c0_12 = arith.constant 0 : index
    %c0_13 = arith.constant 0 : index
    %14 = vector.load %arg8[%c0_12, %c0_13] : memref<8x1xf32, #tpu.memory_space<vmem>>, vector<8x1xf32>
    %15 = arith.mulf %11, %11 : vector<8x128xf32>
    %cst_14 = arith.constant dense<0.000000e+00> : vector<8xf32>
    %16 = vector.multi_reduction <add>, %15, %cst_14 [1] : vector<8x128xf32> to vector<8xf32>
    %17 = vector.shape_cast %16 : vector<8xf32> to vector<8x1xf32>
    %18 = arith.addf %14, %17 : vector<8x1xf32>
    %c0_15 = arith.constant 0 : index
    %c0_16 = arith.constant 0 : index
    %19 = vector.load %arg8[%c0_15, %c0_16] : memref<8x1xf32, #tpu.memory_space<vmem>>, vector<8x1xf32>
    tpu.vector_store %arg8[%c0_15, %c0_16], %18 {strides = array<i32>} : memref<8x1xf32, #tpu.memory_space<vmem>>, vector<8x1xf32>,
    %c0_17 = arith.constant 0 : index
    %c0_18 = arith.constant 0 : index
    %20 = vector.load %arg9[%c0_17, %c0_18] : memref<8x1xf32, #tpu.memory_space<vmem>>, vector<8x1xf32>
    %21 = arith.mulf %13, %13 : vector<8x128xf32>
    %cst_19 = arith.constant dense<0.000000e+00> : vector<8xf32>
    %22 = vector.multi_reduction <add>, %21, %cst_19 [1] : vector<8x128xf32> to vector<8xf32>
    %23 = vector.shape_cast %22 : vector<8xf32> to vector<8x1xf32>
    %24 = arith.addf %20, %23 : vector<8x1xf32>
    %c0_20 = arith.constant 0 : index
    %c0_21 = arith.constant 0 : index
    %25 = vector.load %arg9[%c0_20, %c0_21] : memref<8x1xf32, #tpu.memory_space<vmem>>, vector<8x1xf32>
    tpu.vector_store %arg9[%c0_20, %c0_21], %24 {strides = array<i32>} : memref<8x1xf32, #tpu.memory_space<vmem>>, vector<8x1xf32>,
    %c0_22 = arith.constant 0 : index
    %c0_23 = arith.constant 0 : index
    %26 = vector.load %arg10[%c0_22, %c0_23] : memref<8x1xf32, #tpu.memory_space<vmem>>, vector<8x1xf32>
    %27 = arith.mulf %11, %13 : vector<8x128xf32>
    %cst_24 = arith.constant dense<0.000000e+00> : vector<8xf32>
    %28 = vector.multi_reduction <add>, %27, %cst_24 [1] : vector<8x128xf32> to vector<8xf32>
    %29 = vector.shape_cast %28 : vector<8xf32> to vector<8x1xf32>
    %30 = arith.addf %26, %29 : vector<8x1xf32>
    %c0_25 = arith.constant 0 : index
    %c0_26 = arith.constant 0 : index
    %31 = vector.load %arg10[%c0_25, %c0_26] : memref<8x1xf32, #tpu.memory_space<vmem>>, vector<8x1xf32>
    tpu.vector_store %arg10[%c0_25, %c0_26], %30 {strides = array<i32>} : memref<8x1xf32, #tpu.memory_space<vmem>>, vector<8x1xf32>,
    %c0_i32_27 = arith.constant 0 : i32
    %32 = arith.cmpi eq, %arg1, %c0_i32_27 : i32
    %33 = arith.extui %32 : i1 to i32
    %c0_i32_28 = arith.constant 0 : i32
    %34 = arith.cmpi ne, %33, %c0_i32_28 : i32
    scf.if %34 {
      %c0_29 = arith.constant 0 : index
      %35 = memref.load %arg2[%c0_29] : memref<1xi32, #tpu.memory_space<smem>>
      %36 = arith.sitofp %35 : i32 to f32
      %c0_30 = arith.constant 0 : index
      %c0_31 = arith.constant 0 : index
      %37 = vector.load %arg8[%c0_30, %c0_31] : memref<8x1xf32, #tpu.memory_space<vmem>>, vector<8x1xf32>
      %cst_32 = arith.constant 9.99999996E-13 : f32
      %38 = vector.broadcast %cst_32 : f32 to vector<8x1xf32>
      %39 = arith.maximumf %37, %38 : vector<8x1xf32>
      %40 = math.rsqrt %39 : vector<8x1xf32>
      %c0_33 = arith.constant 0 : index
      %c0_34 = arith.constant 0 : index
      %41 = vector.load %arg9[%c0_33, %c0_34] : memref<8x1xf32, #tpu.memory_space<vmem>>, vector<8x1xf32>
      %cst_35 = arith.constant 9.99999996E-13 : f32
      %42 = vector.broadcast %cst_35 : f32 to vector<8x1xf32>
      %43 = arith.maximumf %41, %42 : vector<8x1xf32>
      %44 = math.rsqrt %43 : vector<8x1xf32>
      %c0_36 = arith.constant 0 : index
      %c0_37 = arith.constant 0 : index
      %45 = vector.load %arg10[%c0_36, %c0_37] : memref<8x1xf32, #tpu.memory_space<vmem>>, vector<8x1xf32>
      %46 = arith.mulf %45, %40 : vector<8x1xf32>
      %47 = arith.mulf %46, %44 : vector<8x1xf32>
      %48 = tpu.iota {dimensions = array<i32: 0>} : vector<8x1xi32>
      %49 = vector.broadcast %35 : i32 to vector<8x1xi32>
      %50 = arith.cmpi slt, %48, %49 : vector<8x1xi32>
      %cst_38 = arith.constant 0.000000e+00 : f32
      %51 = vector.broadcast %cst_38 : f32 to vector<8x1xf32>
      %52 = arith.select %50, %47, %51 : vector<8x1xi1>, vector<8x1xf32>
      %cst_39 = arith.constant 2.000000e+00 : f32
      %53 = arith.divf %cst_39, %36 : f32
      %54 = vector.shape_cast %52 : vector<8x1xf32> to vector<1x8x1xf32>
      %cst_40 = arith.constant dense<0.000000e+00> : vector<1xf32>
      %55 = vector.multi_reduction <add>, %54, %cst_40 [1, 2] : vector<1x8x1xf32> to vector<1xf32>
      %56 = vector.shape_cast %55 : vector<1xf32> to vector<1x1x1xf32>
      %57 = vector.extract %56[0, 0, 0] : f32 from vector<1x1x1xf32>
      %58 = arith.mulf %53, %57 : f32
      %cst_41 = arith.constant 2.000000e+00 : f32
      %59 = arith.subf %cst_41, %58 : f32
      %60 = vector.broadcast %59 : f32 to vector<1x8x128xf32>
      %c0_42 = arith.constant 0 : index
      %c0_43 = arith.constant 0 : index
      %c0_44 = arith.constant 0 : index
      %61 = vector.load %arg7[%c0_42, %c0_43, %c0_44] : memref<1x8x128xf32, #tpu.memory_space<vmem>>, vector<1x8x128xf32>
      tpu.vector_store %arg7[%c0_42, %c0_43, %c0_44], %60 {strides = array<i32>} : memref<1x8x128xf32, #tpu.memory_space<vmem>>, vector<1x8x128xf32>,
    } else {
    }
    return
  }
  func.func @transform_0(%arg0: i32, %arg1: i32, %arg2: memref<1xi32, #tpu.memory_space<smem>>) -> (i32, i32, i32) {
    %c0_i32 = arith.constant 0 : i32
    %c0_i32_0 = arith.constant 0 : i32
    %c0_i32_1 = arith.constant 0 : i32
    return %arg0, %c0_i32, %c0_i32_0 : i32, i32, i32
  }
  func.func @transform_1(%arg0: i32, %arg1: i32, %arg2: memref<1xi32, #tpu.memory_space<smem>>) -> (i32, i32, i32) {
    %c0_i32 = arith.constant 0 : i32
    %c0_i32_0 = arith.constant 0 : i32
    return %arg0, %c0_i32, %arg1 : i32, i32, i32
  }
  func.func @transform_2(%arg0: i32, %arg1: i32, %arg2: memref<1xi32, #tpu.memory_space<smem>>) -> (i32, i32, i32) {
    %c0_i32 = arith.constant 0 : i32
    %c0_i32_0 = arith.constant 0 : i32
    return %arg0, %c0_i32, %arg1 : i32, i32, i32
  }
  func.func @transform_3(%arg0: i32, %arg1: i32, %arg2: memref<1xi32, #tpu.memory_space<smem>>) -> (i32, i32, i32) {
    %c0_i32 = arith.constant 0 : i32
    %c0_i32_0 = arith.constant 0 : i32
    return %arg0, %c0_i32, %arg1 : i32, i32, i32
  }
  func.func @transform_4(%arg0: i32, %arg1: i32, %arg2: memref<1xi32, #tpu.memory_space<smem>>) -> (i32, i32, i32) {
    %c0_i32 = arith.constant 0 : i32
    %c0_i32_0 = arith.constant 0 : i32
    %c0_i32_1 = arith.constant 0 : i32
    return %arg0, %c0_i32, %c0_i32_0 : i32, i32, i32
  }
}

</mosaic_0001>

<llo_original>
// kernel: tpu_custom_call.1
$region0: #{tpu_custom_call.1}
  #allocation0 [shape = 'u32[]', space=smem, size = 0x4, offset = 0x4, fixed_abs, tag = 'smem constant byte address 0x4 - core index']
  #allocation1 [shape = 'u32[144,128]{1,0:T(1,128)}', space=vmem, size = 0x12000, scoped, tag = 'internal scratch']
  #allocation2 [shape = 'f32[8,1]{1,0:T(8,128)}', space=vmem, size = 0x1000, scoped, tag = 'scratch operand']
  #allocation3 [shape = 'f32[8,1]{1,0:T(8,128)}', space=vmem, size = 0x1000, scoped, tag = 'scratch operand']
  #allocation4 [shape = 'f32[8,1]{1,0:T(8,128)}', space=vmem, size = 0x1000, scoped, tag = 'scratch operand']
  #allocation5 [shape = 's32[1]{0}', space=sflag, size = 0x4, scoped, tag = 'scoped memory for tpu_custom_call.1']
  #allocation6 [shape = 's32[1]{0:T(128)S(6)}', space=smem, size = 0x200, scoped, tag = 'prefetched SMEM operand 0']
  %s0 = inlined_call_operand.<no memory space> [shape: s32[1], index: 0, kind: input, shape index: {}]
  %s1 = inlined_call_operand.hbm [shape: f32[2,8,128], index: 1, kind: input, shape index: {}]
  %s2 = inlined_call_operand.hbm [shape: f32[2,8,128], index: 2, kind: input, shape index: {}]
  %s3 = inlined_call_operand.hbm [shape: f32[2,128,128], index: 3, kind: input, shape index: {}]
  %s4 = inlined_call_operand.vmem [shape: f32[2,1,128], index: 4, kind: input, shape index: {}]
  %s5 = inlined_call_operand.hbm [shape: f32[2,8,128], index: 5, kind: output, shape index: {}]
  %s6 = sld [smem:[#allocation0]]
  $region69: #{tpu_custom_call.1} parent=0
    _
  %s8 = ssub.s32 1, %s6
  %s9 = scalar_select 0, %s8, %s6
  %10 = sst [smem:[#allocation6]] %s0
  $region1: #{tpu_custom_call.1} parent=0
    #allocation7 [shape = 'u8[8192]{0}', space=vmem, size = 0x2000, scoped, tag = 'input window, operand 1']
    #allocation8 [shape = 's32[2]{0}', space=sflag, size = 0x8, scoped, tag = 'scoped memory for tpu_custom_call.1']
    #allocation9 [shape = 's32[2]{0}', space=sflag, size = 0x8, scoped, tag = 'scoped memory for tpu_custom_call.1']
    #allocation10 [shape = 'u8[8192]{0}', space=vmem, size = 0x2000, scoped, tag = 'input window, operand 2']
    #allocation11 [shape = 's32[2]{0}', space=sflag, size = 0x8, scoped, tag = 'scoped memory for tpu_custom_call.1']
    #allocation12 [shape = 'u8[131072]{0}', space=vmem, size = 0x20000, scoped, tag = 'input window, operand 3']
    #allocation13 [shape = 'u8[8192]{0}', space=vmem, size = 0x2000, scoped, tag = 'output window, operand 0']
    %11 = vsyncpa [#allocation8], 0
    %s12 = scalar_lea.sflag [#allocation8], 1
    %13 = vsyncpa %s12, 0
    %14 = vsyncpa [#allocation11], 0
    %s15 = scalar_lea.sflag [#allocation11], 1
    %16 = vsyncpa %s15, 0
    %17 = vsyncpa [#allocation9], 0
    %s18 = scalar_lea.sflag [#allocation9], 1
    %19 = vsyncpa %s18, 0
    loop: start=0, step=1, limit=4
    $region2: #{tpu_custom_call.1} parent=1 // loop_pre_header
      _
    $region3: #{tpu_custom_call.1} parent=1 // loop_header
      %s21 = sphi 0, %s25
      %p22 = scmp.ge.s32.totalorder %s21, 4
      %s28 = sphi 0, %s40
      %s29 = sphi 0, %s36
      %s30 = sphi 0, %s28
      %s31 = sphi 0, %s29
      %s32 = sphi 0, %s30
      %s33 = sphi 0, %s31
      %s43 = sphi 0, %s45
      %s46 = sphi 0, %s43
      %s47 = sphi 0, %s46
      %s63 = sphi 0, %s47
      %s71 = sphi 0, %s73
      %s74 = sphi 0, %s71
      %s75 = sphi 0, %s74
      %s91 = sphi 0, %s75
      %s99 = sphi 0, %s101
      %s102 = sphi 0, %s99
      %s103 = sphi 0, %s102
      %s119 = sphi 0, %s103
      %s127 = sphi 0, %s129
      %s130 = sphi 0, %s127
      %s131 = sphi 0, %s130
      %s147 = sphi 0, %s131
      %s153 = sphi 0, %s155
      %s156 = sphi 0, %s153
      %s157 = sphi 0, %s156
      %s173 = sphi 0, %s157
    $region4: #{tpu_custom_call.1} parent=1 // loop_header_branch
      %24 = sbr.rel (%p22) target = $region8
    $region5: #{tpu_custom_call.1} parent=1 // loop_body
      %s26 = ssub.s32 %s21, 1
      %s27 = ssub.s32 %s21, 2
      %s34 = sadd.s32 1, %s29
      %p35 = scmp.ge.s32.totalorder %s34, 1
      %s36 = scalar_select %p35, 0, %s34
      %s37 = sadd.s32 1, %s28
      %s38 = scalar_select %p35, %s37, %s28
      %p39 = scmp.ge.s32.totalorder %s38, 2
      %s40 = scalar_select %p39, 0, %s38
      %s41 = ssub.s32 %s28, %s40
      %p42 = scmp.eq.s32.totalorder %s41, 0
      %s44 = sadd.s32 %s43, 1
      %s45 = scalar_select %p42, %s43, %s44
      %p48 = pneg %p42
      %p49 = scmp.eq.s32.totalorder %s21, 1
      %p50 = por %p48, %p49
      %p51 = scmp.ne.s32.totalorder %s43, %s46
      %p52 = scmp.eq.s32.totalorder %s21, 0
      %p53 = por %p51, %p52
      %p54 = scmp.ne.s32.totalorder %s43, %s46
      %p55 = scmp.eq.s32.totalorder %s26, 1
      %p56 = por %p54, %p55
      %p57 = scmp.ne.s32.totalorder %s46, %s47
      %p58 = scmp.eq.s32.totalorder %s26, 0
      %p59 = por %p57, %p58
      %p60 = scmp.ne.s32.totalorder %s46, %s47
      %p61 = scmp.eq.s32.totalorder %s27, 1
      %p62 = por %p60, %p61
      %p64 = scmp.ne.s32.totalorder %s47, %s63
      %p65 = scmp.eq.s32.totalorder %s27, 0
      %p66 = por %p64, %p65
      %s67 = ssub.s32 %s28, %s40
      %s68 = ssub.s32 %s29, %s36
      %s69 = sor.u32 %s67, %s68
      %p70 = scmp.eq.s32.totalorder %s69, 0
      %s72 = sadd.s32 %s71, 1
      %s73 = scalar_select %p70, %s71, %s72
      %p76 = pneg %p70
      %p77 = scmp.eq.s32.totalorder %s21, 1
      %p78 = por %p76, %p77
      %p79 = scmp.ne.s32.totalorder %s71, %s74
      %p80 = scmp.eq.s32.totalorder %s21, 0
      %p81 = por %p79, %p80
      %p82 = scmp.ne.s32.totalorder %s71, %s74
      %p83 = scmp.eq.s32.totalorder %s26, 1
      %p84 = por %p82, %p83
      %p85 = scmp.ne.s32.totalorder %s74, %s75
      %p86 = scmp.eq.s32.totalorder %s26, 0
      %p87 = por %p85, %p86
      %p88 = scmp.ne.s32.totalorder %s74, %s75
      %p89 = scmp.eq.s32.totalorder %s27, 1
      %p90 = por %p88, %p89
      %p92 = scmp.ne.s32.totalorder %s75, %s91
      %p93 = scmp.eq.s32.totalorder %s27, 0
      %p94 = por %p92, %p93
      %s95 = ssub.s32 %s28, %s40
      %s96 = ssub.s32 %s29, %s36
      %s97 = sor.u32 %s95, %s96
      %p98 = scmp.eq.s32.totalorder %s97, 0
      %s100 = sadd.s32 %s99, 1
      %s101 = scalar_select %p98, %s99, %s100
      %p104 = pneg %p98
      %p105 = scmp.eq.s32.totalorder %s21, 1
      %p106 = por %p104, %p105
      %p107 = scmp.ne.s32.totalorder %s99, %s102
      %p108 = scmp.eq.s32.totalorder %s21, 0
      %p109 = por %p107, %p108
      %p110 = scmp.ne.s32.totalorder %s99, %s102
      %p111 = scmp.eq.s32.totalorder %s26, 1
      %p112 = por %p110, %p111
      %p113 = scmp.ne.s32.totalorder %s102, %s103
      %p114 = scmp.eq.s32.totalorder %s26, 0
      %p115 = por %p113, %p114
      %p116 = scmp.ne.s32.totalorder %s102, %s103
      %p117 = scmp.eq.s32.totalorder %s27, 1
      %p118 = por %p116, %p117
      %p120 = scmp.ne.s32.totalorder %s103, %s119
      %p121 = scmp.eq.s32.totalorder %s27, 0
      %p122 = por %p120, %p121
      %s123 = ssub.s32 %s28, %s40
      %s124 = ssub.s32 %s29, %s36
      %s125 = sor.u32 %s123, %s124
      %p126 = scmp.eq.s32.totalorder %s125, 0
      %s128 = sadd.s32 %s127, 1
      %s129 = scalar_select %p126, %s127, %s128
      %p132 = pneg %p126
      %p133 = scmp.eq.s32.totalorder %s21, 1
      %p134 = por %p132, %p133
      %p135 = scmp.ne.s32.totalorder %s127, %s130
      %p136 = scmp.eq.s32.totalorder %s21, 0
      %p137 = por %p135, %p136
      %p138 = scmp.ne.s32.totalorder %s127, %s130
      %p139 = scmp.eq.s32.totalorder %s26, 1
      %p140 = por %p138, %p139
      %p141 = scmp.ne.s32.totalorder %s130, %s131
      %p142 = scmp.eq.s32.totalorder %s26, 0
      %p143 = por %p141, %p142
      %p144 = scmp.ne.s32.totalorder %s130, %s131
      %p145 = scmp.eq.s32.totalorder %s27, 1
      %p146 = por %p144, %p145
      %p148 = scmp.ne.s32.totalorder %s131, %s147
      %p149 = scmp.eq.s32.totalorder %s27, 0
      %p150 = por %p148, %p149
      %s151 = ssub.s32 %s28, %s40
      %p152 = scmp.eq.s32.totalorder %s151, 0
      %s154 = sadd.s32 %s153, 1
      %s155 = scalar_select %p152, %s153, %s154
      %p158 = pneg %p152
      %p159 = scmp.eq.s32.totalorder %s21, 1
      %p160 = por %p158, %p159
      %p161 = scmp.ne.s32.totalorder %s153, %s156
      %p162 = scmp.eq.s32.totalorder %s21, 0
      %p163 = por %p161, %p162
      %p164 = scmp.ne.s32.totalorder %s153, %s156
      %p165 = scmp.eq.s32.totalorder %s26, 1
      %p166 = por %p164, %p165
      %p167 = scmp.ne.s32.totalorder %s156, %s157
      %p168 = scmp.eq.s32.totalorder %s26, 0
      %p169 = por %p167, %p168
      %p170 = scmp.ne.s32.totalorder %s156, %s157
      %p171 = scmp.eq.s32.totalorder %s27, 1
      %p172 = por %p170, %p171
      %p174 = scmp.ne.s32.totalorder %s157, %s173
      %p175 = scmp.eq.s32.totalorder %s27, 0
      %p176 = por %p174, %p175
      %p177 = scmp.le.s32.totalorder 1, %s21
      %p178 = scmp.lt.s32.totalorder %s21, 3
      %p179 = pnand %p177, %p178
      %p180 = pneg %p179
      // Predicated region
      $region9: #{tpu_custom_call.1} parent=5 // pred_check
        _
      $region10: #{tpu_custom_call.1} parent=5 // pred_check_branch
        %182 = sbr.rel (%p179) target = $region12
      $region11: #{tpu_custom_call.1} parent=5 // pred_region
        %s183 = ssub.s32 %s21, 1
      $region12: #{tpu_custom_call.1} parent=5 // pred_fallthru
        _
      %p184 = scmp.lt.s32.totalorder %s21, 2
      // Predicated region
      $region13: #{tpu_custom_call.1} parent=5 // pred_check
        %p185 = pneg %p184
      $region14: #{tpu_custom_call.1} parent=5 // pred_check_branch
        %187 = sbr.rel (%p185) target = $region16
      $region15: #{tpu_custom_call.1} parent=5 // pred_region
        // Predicated region
        $region17: #{tpu_custom_call.1} parent=15 // pred_check
          %p188 = pneg %p53
        $region18: #{tpu_custom_call.1} parent=15 // pred_check_branch
          %190 = sbr.rel (%p188) target = $region20
        $region19: #{tpu_custom_call.1} parent=15 // pred_region
          %s191 = sand.u32 %s43, 1
          %s192 = scalar_lea.sflag [#allocation8], %s191
          %s193 = sand.u32 %s43, 1
          %s194 = smul.addr %s193, 8
          %s195 = scalar_lea.vmem [#allocation7], %s194
          %s197 = ssub.s32 128, 128
          %198 = vsyncadd %s192, %s197
          %s199 = smul.addr %s28, 128
          %s200 = scalar_lea.hbm %s1, %s199
          %s202 = sshll.u32 %s195, 4
          %s203 = int_to_ptr.vmem [resolvable:$true] %s202
          %205 = dma.hbm_to_vmem [thread:$0]  %s200, 128, %s203, %s192
        $region20: #{tpu_custom_call.1} parent=15 // pred_fallthru
          _
        // Predicated region
        $region21: #{tpu_custom_call.1} parent=15 // pred_check
          %p206 = pneg %p81
        $region22: #{tpu_custom_call.1} parent=15 // pred_check_branch
          %208 = sbr.rel (%p206) target = $region24
        $region23: #{tpu_custom_call.1} parent=15 // pred_region
          %s209 = sand.u32 %s21, 1
          %s210 = scalar_lea.sflag [#allocation11], %s209
          %s211 = sand.u32 %s71, 1
          %s212 = smul.addr %s211, 8
          %s213 = scalar_lea.vmem [#allocation10], %s212
          %s215 = ssub.s32 128, 128
          %216 = vsyncadd %s210, %s215
          %s217 = sadd.s32 %s29, %s28
          %s218 = smul.addr %s217, 128
          %s219 = scalar_lea.hbm %s2, %s218
          %s221 = sshll.u32 %s213, 4
          %s222 = int_to_ptr.vmem [resolvable:$true] %s221
          %224 = dma.hbm_to_vmem [thread:$0]  %s219, 128, %s222, %s210
        $region24: #{tpu_custom_call.1} parent=15 // pred_fallthru
          _
        // Predicated region
        $region25: #{tpu_custom_call.1} parent=15 // pred_check
          %p225 = pneg %p109
        $region26: #{tpu_custom_call.1} parent=15 // pred_check_branch
          %227 = sbr.rel (%p225) target = $region28
        $region27: #{tpu_custom_call.1} parent=15 // pred_region
          %s228 = sand.u32 %s21, 1
          %s229 = scalar_lea.sflag [#allocation11], %s228
          %s230 = sand.u32 %s99, 1
          %s231 = smul.addr %s230, 128
          %s232 = scalar_lea.vmem [#allocation12], %s231
          %s234 = ssub.s32 2048, 2048
          %235 = vsyncadd %s229, %s234
          %s236 = smul.addr %s28, 16
          %s237 = sadd.s32 %s29, %s236
          %s238 = smul.addr %s237, 128
          %s239 = scalar_lea.hbm %s3, %s238
          %s240 = sshll.u32 %s232, 4
          %s241 = int_to_ptr.vmem [resolvable:$true] %s240
          %246 = dma.hbm_to_vmem [thread:$0]  %s239, 2048, %s241, %s229, 128, 128, 8
        $region28: #{tpu_custom_call.1} parent=15 // pred_fallthru
          _
        // Predicated region
        $region29: #{tpu_custom_call.1} parent=15 // pred_check
          %p247 = pneg %p137
        $region30: #{tpu_custom_call.1} parent=15 // pred_check_branch
          %249 = sbr.rel (%p247) target = $region32
        $region31: #{tpu_custom_call.1} parent=15 // pred_region
          %p250 = scmp.lt.s32.totalorder %s28, 1
          %s251 = scalar_select %p250, %s28, 1
          %p252 = scmp.lt.s32.totalorder %s29, 0
          %s253 = scalar_select %p252, %s29, 0
          %s254 = sadd.s32 %s253, %s251
          %s255 = scalar_lea.vmem %s4, %s254
        $region32: #{tpu_custom_call.1} parent=15 // pred_fallthru
          _
      $region16: #{tpu_custom_call.1} parent=5 // pred_fallthru
        _
      %p256 = scmp.le.s32.totalorder 1, %s21
      %p257 = scmp.lt.s32.totalorder %s21, 3
      %p258 = pnand %p256, %p257
      %p259 = pneg %p258
      // Predicated region
      $region33: #{tpu_custom_call.1} parent=5 // pred_check
        _
      $region34: #{tpu_custom_call.1} parent=5 // pred_check_branch
        %261 = sbr.rel (%p258) target = $region36
      $region35: #{tpu_custom_call.1} parent=5 // pred_region
        %s262 = ssub.s32 %s21, 1
        %s263 = sand.u32 %s46, 1
        %s264 = scalar_lea.sflag [#allocation8], %s263
        %s265 = sand.u32 %s46, 1
        %s266 = smul.addr %s265, 8
        %s267 = scalar_lea.vmem [#allocation7], %s266
        // Predicated region
        $region37: #{tpu_custom_call.1} parent=35 // pred_check
          %p268 = pneg %p59
        $region38: #{tpu_custom_call.1} parent=35 // pred_check_branch
          %270 = sbr.rel (%p268) target = $region40
        $region39: #{tpu_custom_call.1} parent=35 // pred_region
          %271 = dma.done %s264, 128
        $region40: #{tpu_custom_call.1} parent=35 // pred_fallthru
          _
        %s272 = sand.u32 %s26, 1
        %s273 = scalar_lea.sflag [#allocation11], %s272
        %s274 = sand.u32 %s74, 1
        %s275 = smul.addr %s274, 8
        %s276 = scalar_lea.vmem [#allocation10], %s275
        // Predicated region
        $region41: #{tpu_custom_call.1} parent=35 // pred_check
          %p277 = pneg %p87
        $region42: #{tpu_custom_call.1} parent=35 // pred_check_branch
          %279 = sbr.rel (%p277) target = $region44
        $region43: #{tpu_custom_call.1} parent=35 // pred_region
          %280 = dma.done %s273, 128
        $region44: #{tpu_custom_call.1} parent=35 // pred_fallthru
          _
        %s281 = sand.u32 %s26, 1
        %s282 = scalar_lea.sflag [#allocation11], %s281
        %s283 = sand.u32 %s102, 1
        %s284 = smul.addr %s283, 128
        %s285 = scalar_lea.vmem [#allocation12], %s284
        // Predicated region
        $region45: #{tpu_custom_call.1} parent=35 // pred_check
          %p286 = pneg %p115
        $region46: #{tpu_custom_call.1} parent=35 // pred_check_branch
          %288 = sbr.rel (%p286) target = $region48
        $region47: #{tpu_custom_call.1} parent=35 // pred_region
          %289 = dma.done %s282, 2048
        $region48: #{tpu_custom_call.1} parent=35 // pred_fallthru
          _
        %s290 = sand.u32 %s46, 1
        %s291 = scalar_lea.sflag [#allocation8], %s290
        %s292 = sand.u32 %s46, 1
        %s293 = smul.addr %s292, 8
        %s294 = scalar_lea.vmem [#allocation7], %s293
        %p295 = pneg %p59
        %p296 = pneg %p56
        %s297 = sand.u32 %s26, 1
        %s298 = scalar_lea.sflag [#allocation11], %s297
        %s299 = sand.u32 %s74, 1
        %s300 = smul.addr %s299, 8
        %s301 = scalar_lea.vmem [#allocation10], %s300
        %p302 = pneg %p87
        %p303 = pneg %p84
        %s304 = sand.u32 %s26, 1
        %s305 = scalar_lea.sflag [#allocation11], %s304
        %s306 = sand.u32 %s102, 1
        %s307 = smul.addr %s306, 128
        %s308 = scalar_lea.vmem [#allocation12], %s307
        %p309 = pneg %p115
        %p310 = pneg %p112
        %p311 = scmp.lt.s32.totalorder %s30, 1
        %s312 = scalar_select %p311, %s30, 1
        %p313 = scmp.lt.s32.totalorder %s31, 0
        %s314 = scalar_select %p313, %s31, 0
        %s315 = sadd.s32 %s314, %s312
        %s316 = scalar_lea.vmem %s4, %s315
        %p317 = pneg %p143
        %p318 = pneg %p140
        %p319 = pneg %p169
        %p320 = pneg %p166
        %s321 = sand.u32 %s156, 1
        %s322 = scalar_lea.sflag [#allocation9], %s321
        %s323 = sand.u32 %s156, 1
        %s324 = smul.addr %s323, 8
        %s325 = scalar_lea.vmem [#allocation13], %s324
        %p326 = scmp.lt.s32.totalorder %s30, 1
        %s327 = scalar_select %p326, %s30, 1
        %p328 = scmp.lt.s32.totalorder %s31, 0
        %s329 = scalar_select %p328, %s31, 0
        %s330 = sadd.s32 %s329, %s327
        %s331 = scalar_lea.vmem %s4, %s330
        %p332 = scmp.eq.s32.totalorder %s31, 0
        // Predicated region
        $region49: #{tpu_custom_call.1} parent=35 // pred_check
          %p333 = pneg %p332
        $region50: #{tpu_custom_call.1} parent=35 // pred_check_branch
          %335 = sbr.rel (%p333) target = $region52
        $region51: #{tpu_custom_call.1} parent=35 // pred_region
          %vm336 = vcmask 7168
          %337 = vst.msk [vmem:[#allocation2] sm:$0xff] %vm336, 0.0
          %338 = vst.msk [vmem:[#allocation3] sm:$0xff] %vm336, 0.0
          %339 = vst.msk [vmem:[#allocation4] sm:$0xff] %vm336, 0.0
        $region52: #{tpu_custom_call.1} parent=35 // pred_fallthru
          _
        %v340 = vld [vmem:[%s267] sm:$0xff]
        %v341 = vld [vmem:[%s285] sm:$0xff]
        %v342 = vld [vmem:[%s285 + $0x8] sm:$0xff]
        %v343 = vld [vmem:[%s285 + $0x10] sm:$0xff]
        %v344 = vld [vmem:[%s285 + $0x18] sm:$0xff]
        %v345 = vld [vmem:[%s285 + $0x20] sm:$0xff]
        %v346 = vld [vmem:[%s285 + $0x28] sm:$0xff]
        %v347 = vld [vmem:[%s285 + $0x30] sm:$0xff]
        %v348 = vld [vmem:[%s285 + $0x38] sm:$0xff]
        %v349 = vld [vmem:[%s285 + $0x40] sm:$0xff]
        %v350 = vld [vmem:[%s285 + $0x48] sm:$0xff]
        %v351 = vld [vmem:[%s285 + $0x50] sm:$0xff]
        %v352 = vld [vmem:[%s285 + $0x58] sm:$0xff]
        %v353 = vld [vmem:[%s285 + $0x60] sm:$0xff]
        %v354 = vld [vmem:[%s285 + $0x68] sm:$0xff]
        %v355 = vld [vmem:[%s285 + $0x70] sm:$0xff]
        %v356 = vld [vmem:[%s285 + $0x78] sm:$0xff]
        %v357 = vld [vmem:[%s331] sm:$0x1]
        %v359 = vlaneseq
        %v360 = vshrl.u32 %v359, 7
        %v361 = vsub.s32 0, %v360
        %v362 = vrot.slane %v357, %v361
        %364 = vmatprep.subr.mxu0 0.0
        %365 = vmatpush1.msra.mxu0 %v341
        %366 = vmatprep.subr.mxu0 0.0
        %367 = vmatpush1.msra.mxu0 %v342
        %368 = vmatprep.subr.mxu0 0.0
        %369 = vmatpush1.msra.mxu0 %v343
        %370 = vmatprep.subr.mxu0 0.0
        %371 = vmatpush1.msra.mxu0 %v344
        %372 = vmatprep.subr.mxu0 0.0
        %373 = vmatpush1.msra.mxu0 %v345
        %374 = vmatprep.subr.mxu0 0.0
        %375 = vmatpush1.msra.mxu0 %v346
        %376 = vmatprep.subr.mxu0 0.0
        %377 = vmatpush1.msra.mxu0 %v347
        %378 = vmatprep.subr.mxu0 0.0
        %379 = vmatpush1.msra.mxu0 %v348
        %380 = vmatprep.subr.mxu0 0.0
        %381 = vmatpush1.msra.mxu0 %v349
        %382 = vmatprep.subr.mxu0 0.0
        %383 = vmatpush1.msra.mxu0 %v350
        %384 = vmatprep.subr.mxu0 0.0
        %385 = vmatpush1.msra.mxu0 %v351
        %386 = vmatprep.subr.mxu0 0.0
        %387 = vmatpush1.msra.mxu0 %v352
        %388 = vmatprep.subr.mxu0 0.0
        %389 = vmatpush1.msra.mxu0 %v353
        %390 = vmatprep.subr.mxu0 0.0
        %391 = vmatpush1.msra.mxu0 %v354
        %392 = vmatprep.subr.mxu0 0.0
        %393 = vmatpush1.msra.mxu0 %v355
        %394 = vmatprep.subr.mxu0 0.0
        %395 = vmatpush1.msra.mxu0 %v356
        %396 = vmatprep.subr.mxu0 0.0
        %397 = vmatpush1.msra.mxu0 0.0
        %398 = vmatprep.subr.mxu0 0.0
        %399 = vmatpush1.msra.mxu0 0.0
        %400 = vmatprep.subr.mxu0 0.0
        %401 = vmatpush1.msra.mxu0 0.0
        %402 = vmatprep.subr.mxu0 0.0
        %403 = vmatpush1.msra.mxu0 0.0
        %404 = vmatprep.subr.mxu0 0.0
        %405 = vmatpush1.msra.mxu0 0.0
        %406 = vmatprep.subr.mxu0 0.0
        %407 = vmatpush1.msra.mxu0 0.0
        %408 = vmatprep.subr.mxu0 0.0
        %409 = vmatpush1.msra.mxu0 0.0
        %410 = vmatprep.subr.mxu0 0.0
        %411 = vmatpush1.msra.mxu0 0.0
        %412 = vmatprep.subr.mxu0 0.0
        %413 = vmatpush1.msra.mxu0 0.0
        %414 = vmatprep.subr.mxu0 0.0
        %415 = vmatpush1.msra.mxu0 0.0
        %416 = vmatprep.subr.mxu0 0.0
        %417 = vmatpush1.msra.mxu0 0.0
        %418 = vmatprep.subr.mxu0 0.0
        %419 = vmatpush1.msra.mxu0 0.0
        %420 = vmatprep.subr.mxu0 0.0
        %421 = vmatpush1.msra.mxu0 0.0
        %422 = vmatprep.subr.mxu0 0.0
        %423 = vmatpush1.msra.mxu0 0.0
        %424 = vmatprep.subr.mxu0 0.0
        %425 = vmatpush1.msra.mxu0 0.0
        %426 = vmatprep.subr.mxu0 0.0
        %427 = vmatpush1.msra.mxu0 0.0
        %428 = vmatprep.mubr.f32.mxu0 0.0
        %429 = vmatmul.mubr.f32.gmra.mrb[0].mxu0 %v340
        %v430 = vpop.f32.mrb[0].mxu0
        %v431 = vadd.f32 %v362, %v430
        %v432 = vpop.f32.mrb[0].mxu0
        %433 = vdwg.mxu0
        %v434 = vld [vmem:[%s276] sm:$0xff]
        %v435 = vld [vmem:[#allocation2] sm:$0xff]
        %v436 = vmul.f32 %v431, %v431
        %437 = vadd.xlane.f32.xlu0 %v436
        %v438 = vpop.xlane.xlu0 %437
        %v439 = vadd.f32 %v435, %v438
        %vm440 = vcmask 7168
        %441 = vst.msk [vmem:[#allocation2] sm:$0xff] %vm440, %v439
        %v442 = vld [vmem:[#allocation3] sm:$0xff]
        %v443 = vmul.f32 %v434, %v434
        %444 = vadd.xlane.f32.xlu0 %v443
        %v445 = vpop.xlane.xlu0 %444
        %v446 = vadd.f32 %v442, %v445
        %447 = vst.msk [vmem:[#allocation3] sm:$0xff] %vm440, %v446
        %v448 = vld [vmem:[#allocation4] sm:$0xff]
        %v449 = vmul.f32 %v431, %v434
        %450 = vadd.xlane.f32.xlu0 %v449
        %v451 = vpop.xlane.xlu0 %450
        %v452 = vadd.f32 %v448, %v451
        %453 = vst.msk [vmem:[#allocation4] sm:$0xff] %vm440, %v452
        // Predicated region
        $region53: #{tpu_custom_call.1} parent=35 // pred_check
          %p454 = pneg %p332
        $region54: #{tpu_custom_call.1} parent=35 // pred_check_branch
          %456 = sbr.rel (%p454) target = $region56
        $region55: #{tpu_custom_call.1} parent=35 // pred_region
          %s457 = sld [smem:[#allocation6]]
          %s458 = scvt.s32.f32 %s457
          %v459 = vld [vmem:[#allocation2] sm:$0xff]
          %v460 = vmax.f32 %v459, 1e-12
          %v461 = vrsqrt.pop %v460
          %v462 = vld [vmem:[#allocation3] sm:$0xff]
          %v463 = vmax.f32 %v462, 1e-12
          %v464 = vrsqrt.pop %v463
          %v465 = vld [vmem:[#allocation4] sm:$0xff]
          %v466 = vmul.f32 %v465, %v461
          %v467 = vmul.f32 %v466, %v464
          %v468 = vlaneseq
          %v469 = vshrl.u32 %v468, 7
          %v470 = vstv %s457
          %vm471 = vcmp.lt.s32.totalorder %v469, %v470
          %v472 = vsel %vm471, %v467, 0.0
          %v473 = vstv %s458
          %v474 = vrcp.pop %v473
          %s475 = vtos %v474
          %s476 = smul.f32 2.0, %s475
          %v477 = vsel %vm440, %v472, 0.0
          %478 = vadd.xlane.f32.xlu0 %v477
          %v479 = vpop.xlane.xlu0 %478
          %v480 = vrot.slane %v479, 4
          %v481 = vadd.f32 %v479, %v480
          %v482 = vrot.slane %v481, 2
          %v483 = vadd.f32 %v481, %v482
          %v484 = vrot.slane %v483, 1
          %v485 = vadd.f32 %v483, %v484
          %s486 = vtos %v485
          %s487 = smul.f32 %s476, %s486
          %s488 = ssub.f32 2.0, %s487
          %v489 = vstv %s488
          %490 = vst [vmem:[%s325] sm:$0xff] %v489
        $region56: #{tpu_custom_call.1} parent=35 // pred_fallthru
          _
        %s491 = sand.u32 %s156, 1
        %s492 = scalar_lea.sflag [#allocation9], %s491
        %s493 = sand.u32 %s156, 1
        %s494 = smul.addr %s493, 8
        %s495 = scalar_lea.vmem [#allocation13], %s494
        // Predicated region
        $region57: #{tpu_custom_call.1} parent=35 // pred_check
          %p496 = pneg %p166
        $region58: #{tpu_custom_call.1} parent=35 // pred_check_branch
          %498 = sbr.rel (%p496) target = $region60
        $region59: #{tpu_custom_call.1} parent=35 // pred_region
          %s500 = ssub.s32 128, 128
          %501 = vsyncadd %s492, %s500
          %s502 = smul.addr %s30, 128
          %s503 = scalar_lea.hbm %s5, %s502
          %s505 = sshll.u32 %s495, 4
          %s506 = int_to_ptr.vmem [resolvable:$true] %s505
          %508 = dma.vmem_to_hbm [thread:$0]  %s506, 128, %s503, %s492
        $region60: #{tpu_custom_call.1} parent=35 // pred_fallthru
          _
      $region36: #{tpu_custom_call.1} parent=5 // pred_fallthru
        _
      %p509 = scmp.le.s32.totalorder 2, %s21
      // Predicated region
      $region61: #{tpu_custom_call.1} parent=5 // pred_check
        %p510 = pneg %p509
      $region62: #{tpu_custom_call.1} parent=5 // pred_check_branch
        %512 = sbr.rel (%p510) target = $region64
      $region63: #{tpu_custom_call.1} parent=5 // pred_region
        %s513 = ssub.s32 %s21, 2
        // Predicated region
        $region65: #{tpu_custom_call.1} parent=63 // pred_check
          %p514 = pneg %p172
        $region66: #{tpu_custom_call.1} parent=63 // pred_check_branch
          %516 = sbr.rel (%p514) target = $region68
        $region67: #{tpu_custom_call.1} parent=63 // pred_region
          %s517 = sand.u32 %s157, 1
          %s518 = scalar_lea.sflag [#allocation9], %s517
          %s519 = sand.u32 %s157, 1
          %s520 = smul.addr %s519, 8
          %s521 = scalar_lea.vmem [#allocation13], %s520
          %522 = dma.done %s518, 128
        $region68: #{tpu_custom_call.1} parent=63 // pred_fallthru
          _
      $region64: #{tpu_custom_call.1} parent=5 // pred_fallthru
        _
    $region6: #{tpu_custom_call.1} parent=1 // loop_footer
      %s25 = sadd.s32 1, %s21
    $region7: #{tpu_custom_call.1} parent=1 // loop_footer_branch
      %20 = sbr.rel target = $region3
    $region8: #{tpu_custom_call.1} parent=1 // loop_exit
      _
    %523 = vsyncpa [#allocation8], 1
    %s524 = scalar_lea.sflag [#allocation8], 1
    %525 = vsyncpa %s524, 1
    %526 = vsyncpa [#allocation11], 1
    %s527 = scalar_lea.sflag [#allocation11], 1
    %528 = vsyncpa %s527, 1
    %529 = vsyncpa [#allocation9], 1
    %s530 = scalar_lea.sflag [#allocation9], 1
    %531 = vsyncpa %s530, 1

</llo_original>
